<compile_context>
chip_gen: v7x
topology: tpu7x:2x2x1
jax: 0.10.0
libtpu: 0.0.40
codegen_flags: <defaults>
</compile_context>

<pallas_src>
import jax
import jax.numpy as jnp
from jax.experimental import pallas as pl
from jax.experimental.pallas import tpu as pltpu


def _scale_bias_kernel(w_ref, b_ref, x_ref, o_ref):
    # w_ref, b_ref: (1,) f32 scalars in SMEM.
    # x_ref, o_ref: (TILE_R, LANE) tiles in VMEM.
    # Conv2d(1,1,(1,1)) on one channel is exactly x*w + b; MaxPool(1,1) is identity.
    o_ref[...] = (x_ref[...] * w_ref[0] + b_ref[0]).astype(o_ref.dtype)


def _largest_divisor_leq(n, cap):
    """Largest divisor of n that is <= cap (cap is small, <= ~256)."""
    cap = max(1, min(cap, n))
    for d in range(cap, 0, -1):
        if n % d == 0:
            return d
    return 1


def mmodel_forward(x_nchw, weight, bias, *, min_pallas_bytes=256 * 1024,
                   alias_input_output=False):
    """MMODEL forward.  x_nchw: (N, 1, H, W); weight: (1,1,1,1); bias: (1,)."""
    n, c, h, w = x_nchw.shape
    assert c == 1, "MMODEL uses a single input channel"

    dtype = x_nchw.dtype
    itemsize = jnp.dtype(dtype).itemsize
    total = n * c * h * w
    total_bytes = total * itemsize

    w_scalar = weight.reshape(1).astype(jnp.float32)
    b_scalar = bias.reshape(1).astype(jnp.float32)

    def _xla_fallback():
        # Tiny or ragged shapes: XLA's fused elementwise is already at roofline,
        # and avoids any pad/slice extra HBM pass.
        return (x_nchw * w_scalar[0] + b_scalar[0]).astype(dtype)

    # Small-input short-circuit: kernel launch / per-step overhead dominates.
    if total_bytes < min_pallas_bytes:
        return _xla_fallback()

    # Lane-dense layout: last dim a multiple of 128, rows a multiple of the
    # sublane pack (8 for f32, 16 for bf16, ...), picked so the flat reshape is
    # exact (zero-copy) — no padding, no final slice.
    packing = max(1, 4 // itemsize)
    sublane = 8 * packing
    lane = None
    for cand in (512, 256, 128):
        if total % (sublane * cand) == 0:
            lane = cand
            break
    if lane is None:
        # Ragged total: padding would cost a full extra HBM pass; XLA wins here.
        return _xla_fallback()

    rows = total // lane
    m = rows // sublane  # rows in units of the sublane pack

    # Tile selection: biggest tile <= ~4 MiB whose row count exactly divides
    # `rows`, while keeping enough grid steps for megacore + pipelining
    # (>= 8 steps for big slabs, >= 2 otherwise).
    target_tile_bytes = 4 << 20
    t_max = max(1, target_tile_bytes // (sublane * lane * itemsize))
    min_grid = 8 if total_bytes >= (4 << 20) else 2
    cap = min(t_max, max(1, m // min_grid))
    t = _largest_divisor_leq(m, cap)
    tile_r = sublane * t
    grid = (rows // tile_r,)

    x2d = x_nchw.reshape(rows, lane)  # exact, contiguous -> no copy

    out2d = pl.pallas_call(
        _scale_bias_kernel,
        out_shape=jax.ShapeDtypeStruct((rows, lane), dtype),
        grid=grid,
        in_specs=[
            pl.BlockSpec(memory_space=pltpu.MemorySpace.SMEM),   # weight scalar
            pl.BlockSpec(memory_space=pltpu.MemorySpace.SMEM),   # bias scalar
            pl.BlockSpec((tile_r, lane), lambda i: (i, 0)),      # input tile
        ],
        out_specs=pl.BlockSpec((tile_r, lane), lambda i: (i, 0)),
        compiler_params=pltpu.CompilerParams(
            dimension_semantics=("parallel",),
            vmem_limit_bytes=48 << 20,
        ),
        cost_estimate=pl.CostEstimate(
            flops=2 * total,
            transcendentals=0,
            bytes_accessed=2 * total * itemsize,
        ),
        # Opt-in: reuse the input HBM buffer for the output (donate x at the
        # jit boundary when enabling this; keeps x unusable afterwards).
        input_output_aliases=({2: 0} if alias_input_output else {}),
    )(w_scalar, b_scalar, x2d)

    return out2d.reshape(n, c, h, w)  # contiguous reshape -> no copy


if __name__ == "__main__":
    key = jax.random.PRNGKey(0)
    kx, kw, kb = jax.random.split(key, 3)

    # Small shapes consistent with the module: NCHW with C=1.
    x = jax.random.normal(kx, (2, 1, 64, 64), dtype=jnp.float32)

    # Conv2d(1, 1, (1, 1)) parameters: weight (1,1,1,1), bias (1,).
    weight = jax.random.normal(kw, (1, 1, 1, 1), dtype=jnp.float32)
    bias = jax.random.normal(kb, (1,), dtype=jnp.float32)

    # Force the Pallas path for this small demo tensor (the default threshold
    # would route it to the trivially-fused XLA path).
    out = mmodel_forward(x, weight, bias, min_pallas_bytes=0)
    out = jax.block_until_ready(out)

    # Reference check in plain JAX.
    ref = x * weight.reshape(()) + bias.reshape(())
    assert out.shape == x.shape
    assert out.dtype == x.dtype
    assert jnp.allclose(out, ref, atol=1e-6), "mismatch vs reference"

    print("KERNEL_OK")
</pallas_src>

<mosaic_0001>
module attributes {stable_mosaic.version = 11 : i64} {
  func.func @_scale_bias_kernel(%arg0: i32, %arg1: memref<1xf32, #tpu.memory_space<smem>>, %arg2: memref<1xf32, #tpu.memory_space<smem>>, %arg3: memref<8x512xf32, #tpu.memory_space<vmem>>, %arg4: memref<8x512xf32, #tpu.memory_space<vmem>>) attributes {dimension_semantics = [#tpu.dimension_semantics<parallel>], iteration_bounds = array<i64: 2>, scalar_prefetch = 0 : i64, scratch_operands = 0 : i64, tpu.core_type = #tpu.core_type<tc>, window_params = [{transform_indices = @transform_0, window_bounds = array<i64: 1>}, {transform_indices = @transform_1, window_bounds = array<i64: 1>}, {transform_indices = @transform_2, window_bounds = array<i64: 8, 512>}, {transform_indices = @transform_3, window_bounds = array<i64: 8, 512>}]} {
    %c0 = arith.constant 0 : index
    %c0_0 = arith.constant 0 : index
    %0 = vector.load %arg3[%c0, %c0_0] : memref<8x512xf32, #tpu.memory_space<vmem>>, vector<8x512xf32>
    %c0_1 = arith.constant 0 : index
    %1 = memref.load %arg1[%c0_1] : memref<1xf32, #tpu.memory_space<smem>>
    %2 = vector.broadcast %1 : f32 to vector<8x512xf32>
    %3 = arith.mulf %0, %2 : vector<8x512xf32>
    %c0_2 = arith.constant 0 : index
    %4 = memref.load %arg2[%c0_2] : memref<1xf32, #tpu.memory_space<smem>>
    %5 = vector.broadcast %4 : f32 to vector<8x512xf32>
    %6 = arith.addf %3, %5 : vector<8x512xf32>
    %c0_3 = arith.constant 0 : index
    %c0_4 = arith.constant 0 : index
    %7 = vector.load %arg4[%c0_3, %c0_4] : memref<8x512xf32, #tpu.memory_space<vmem>>, vector<8x512xf32>
    tpu.vector_store %arg4[%c0_3, %c0_4], %6 {strides = array<i32>} : memref<8x512xf32, #tpu.memory_space<vmem>>, vector<8x512xf32>,
    return
  }
  func.func @transform_0(%arg0: i32) -> i32 {
    %c0_i32 = arith.constant 0 : i32
    %c0_i32_0 = arith.constant 0 : i32
    return %c0_i32 : i32
  }
  func.func @transform_1(%arg0: i32) -> i32 {
    %c0_i32 = arith.constant 0 : i32
    %c0_i32_0 = arith.constant 0 : i32
    return %c0_i32 : i32
  }
  func.func @transform_2(%arg0: i32) -> (i32, i32) {
    %c0_i32 = arith.constant 0 : i32
    %c0_i32_0 = arith.constant 0 : i32
    return %arg0, %c0_i32 : i32, i32
  }
  func.func @transform_3(%arg0: i32) -> (i32, i32) {
    %c0_i32 = arith.constant 0 : i32
    %c0_i32_0 = arith.constant 0 : i32
    return %arg0, %c0_i32 : i32, i32
  }
}

</mosaic_0001>

<llo_original>
// kernel: tpu_custom_call.1
$region0: #{tpu_custom_call.1}
  #allocation0 [shape = 'u32[]', space=smem, size = 0x4, offset = 0x4, fixed_abs, tag = 'smem constant byte address 0x4 - core index']
  #allocation1 [shape = 'u32[144,128]{1,0:T(1,128)}', space=vmem, size = 0x12000, scoped, tag = 'internal scratch']
  #allocation2 [shape = 'f32[1]{0:T(128)S(6)}', space=smem, size = 0x200, scoped, tag = 'scoped memory for tpu_custom_call.1']
  #allocation3 [shape = 'f32[1]{0:T(128)S(6)}', space=smem, size = 0x200, scoped, tag = 'scoped memory for tpu_custom_call.1']
  %s0 = inlined_call_operand.<no memory space> [shape: f32[1], index: 0, kind: input, shape index: {}]
  %s1 = inlined_call_operand.<no memory space> [shape: f32[1], index: 1, kind: input, shape index: {}]
  %s2 = inlined_call_operand.hbm [shape: f32[16,512], index: 2, kind: input, shape index: {}]
  %s3 = inlined_call_operand.hbm [shape: f32[16,512], index: 3, kind: output, shape index: {}]
  %s4 = sld [smem:[#allocation0]]
  $region49: #{tpu_custom_call.1} parent=0
    _
  %s6 = ssub.s32 1, %s4
  %s7 = scalar_select 0, %s6, %s4
  %8 = sst [smem:[#allocation2]] %s0
  %9 = sst [smem:[#allocation3]] %s1
  $region1: #{tpu_custom_call.1} parent=0
    #allocation4 [shape = 'u8[32768]{0}', space=vmem, size = 0x8000, scoped, tag = 'input window, operand 2']
    #allocation5 [shape = 's32[2]{0}', space=sflag, size = 0x8, scoped, tag = 'scoped memory for tpu_custom_call.1']
    #allocation6 [shape = 's32[2]{0}', space=sflag, size = 0x8, scoped, tag = 'scoped memory for tpu_custom_call.1']
    #allocation7 [shape = 'u8[32768]{0}', space=vmem, size = 0x8000, scoped, tag = 'output window, operand 0']
    %10 = vsyncpa [#allocation5], 0
    %s11 = scalar_lea.sflag [#allocation5], 1
    %12 = vsyncpa %s11, 0
    %13 = vsyncpa [#allocation6], 0
    %s14 = scalar_lea.sflag [#allocation6], 1
    %15 = vsyncpa %s14, 0
    loop: start=0, step=1, limit=4
    $region2: #{tpu_custom_call.1} parent=1 // loop_pre_header
      _
    $region3: #{tpu_custom_call.1} parent=1 // loop_header
      %s17 = sphi 0, %s21
      %p18 = scmp.ge.s32.totalorder %s17, 4
      %s25 = sphi 0, %s25
      %s27 = sphi 0, %s25
      %s28 = sphi 0, %s27
      %s42 = sphi 0, %s28
      %s46 = sphi 0, %s46
      %s48 = sphi 0, %s46
      %s49 = sphi 0, %s48
      %s63 = sphi 0, %s49
      %s69 = sphi 0, %s71
      %s72 = sphi 0, %s69
      %s73 = sphi 0, %s72
      %s89 = sphi 0, %s73
      %s95 = sphi 0, %s97
      %s98 = sphi 0, %s95
      %s99 = sphi 0, %s98
      %s115 = sphi 0, %s99
    $region4: #{tpu_custom_call.1} parent=1 // loop_header_branch
      %20 = sbr.rel (%p18) target = $region8
    $region5: #{tpu_custom_call.1} parent=1 // loop_body
      %s22 = ssub.s32 %s17, 1
      %s23 = ssub.s32 %s17, 2
      %s24 = sadd.s32 %s17, 1
      %s26 = sadd.s32 %s25, 1
      %p29 = scmp.eq.s32.totalorder %s17, 1
      %p30 = scmp.ne.s32.totalorder %s25, %s27
      %p31 = scmp.eq.s32.totalorder %s17, 0
      %p32 = por %p30, %p31
      %p33 = scmp.ne.s32.totalorder %s25, %s27
      %p34 = scmp.eq.s32.totalorder %s22, 1
      %p35 = por %p33, %p34
      %p36 = scmp.ne.s32.totalorder %s27, %s28
      %p37 = scmp.eq.s32.totalorder %s22, 0
      %p38 = por %p36, %p37
      %p39 = scmp.ne.s32.totalorder %s27, %s28
      %p40 = scmp.eq.s32.totalorder %s23, 1
      %p41 = por %p39, %p40
      %p43 = scmp.ne.s32.totalorder %s28, %s42
      %p44 = scmp.eq.s32.totalorder %s23, 0
      %p45 = por %p43, %p44
      %s47 = sadd.s32 %s46, 1
      %p50 = scmp.eq.s32.totalorder %s17, 1
      %p51 = scmp.ne.s32.totalorder %s46, %s48
      %p52 = scmp.eq.s32.totalorder %s17, 0
      %p53 = por %p51, %p52
      %p54 = scmp.ne.s32.totalorder %s46, %s48
      %p55 = scmp.eq.s32.totalorder %s22, 1
      %p56 = por %p54, %p55
      %p57 = scmp.ne.s32.totalorder %s48, %s49
      %p58 = scmp.eq.s32.totalorder %s22, 0
      %p59 = por %p57, %p58
      %p60 = scmp.ne.s32.totalorder %s48, %s49
      %p61 = scmp.eq.s32.totalorder %s23, 1
      %p62 = por %p60, %p61
      %p64 = scmp.ne.s32.totalorder %s49, %s63
      %p65 = scmp.eq.s32.totalorder %s23, 0
      %p66 = por %p64, %p65
      %s67 = ssub.s32 %s17, %s24
      %p68 = scmp.eq.s32.totalorder %s67, 0
      %s70 = sadd.s32 %s69, 1
      %s71 = scalar_select %p68, %s69, %s70
      %p74 = pneg %p68
      %p75 = scmp.eq.s32.totalorder %s17, 1
      %p76 = por %p74, %p75
      %p77 = scmp.ne.s32.totalorder %s69, %s72
      %p78 = scmp.eq.s32.totalorder %s17, 0
      %p79 = por %p77, %p78
      %p80 = scmp.ne.s32.totalorder %s69, %s72
      %p81 = scmp.eq.s32.totalorder %s22, 1
      %p82 = por %p80, %p81
      %p83 = scmp.ne.s32.totalorder %s72, %s73
      %p84 = scmp.eq.s32.totalorder %s22, 0
      %p85 = por %p83, %p84
      %p86 = scmp.ne.s32.totalorder %s72, %s73
      %p87 = scmp.eq.s32.totalorder %s23, 1
      %p88 = por %p86, %p87
      %p90 = scmp.ne.s32.totalorder %s73, %s89
      %p91 = scmp.eq.s32.totalorder %s23, 0
      %p92 = por %p90, %p91
      %s93 = ssub.s32 %s17, %s24
      %p94 = scmp.eq.s32.totalorder %s93, 0
      %s96 = sadd.s32 %s95, 1
      %s97 = scalar_select %p94, %s95, %s96
      %p100 = pneg %p94
      %p101 = scmp.eq.s32.totalorder %s17, 1
      %p102 = por %p100, %p101
      %p103 = scmp.ne.s32.totalorder %s95, %s98
      %p104 = scmp.eq.s32.totalorder %s17, 0
      %p105 = por %p103, %p104
      %p106 = scmp.ne.s32.totalorder %s95, %s98
      %p107 = scmp.eq.s32.totalorder %s22, 1
      %p108 = por %p106, %p107
      %p109 = scmp.ne.s32.totalorder %s98, %s99
      %p110 = scmp.eq.s32.totalorder %s22, 0
      %p111 = por %p109, %p110
      %p112 = scmp.ne.s32.totalorder %s98, %s99
      %p113 = scmp.eq.s32.totalorder %s23, 1
      %p114 = por %p112, %p113
      %p116 = scmp.ne.s32.totalorder %s99, %s115
      %p117 = scmp.eq.s32.totalorder %s23, 0
      %p118 = por %p116, %p117
      %p119 = scmp.le.s32.totalorder 1, %s17
      %p120 = scmp.lt.s32.totalorder %s17, 3
      %p121 = pnand %p119, %p120
      %p122 = pneg %p121
      // Predicated region
      $region9: #{tpu_custom_call.1} parent=5 // pred_check
        _
      $region10: #{tpu_custom_call.1} parent=5 // pred_check_branch
        %124 = sbr.rel (%p121) target = $region12
      $region11: #{tpu_custom_call.1} parent=5 // pred_region
        %s125 = ssub.s32 %s17, 1
        // Predicated region
        $region13: #{tpu_custom_call.1} parent=11 // pred_check
          %p126 = pneg %p38
        $region14: #{tpu_custom_call.1} parent=11 // pred_check_branch
          %128 = sbr.rel (%p126) target = $region16
        $region15: #{tpu_custom_call.1} parent=11 // pred_region
          _
        $region16: #{tpu_custom_call.1} parent=11 // pred_fallthru
          _
        // Predicated region
        $region17: #{tpu_custom_call.1} parent=11 // pred_check
          %p129 = pneg %p59
        $region18: #{tpu_custom_call.1} parent=11 // pred_check_branch
          %131 = sbr.rel (%p129) target = $region20
        $region19: #{tpu_custom_call.1} parent=11 // pred_region
          _
        $region20: #{tpu_custom_call.1} parent=11 // pred_fallthru
          _
      $region12: #{tpu_custom_call.1} parent=5 // pred_fallthru
        _
      %p132 = scmp.lt.s32.totalorder %s17, 2
      // Predicated region
      $region21: #{tpu_custom_call.1} parent=5 // pred_check
        %p133 = pneg %p132
      $region22: #{tpu_custom_call.1} parent=5 // pred_check_branch
        %135 = sbr.rel (%p133) target = $region24
      $region23: #{tpu_custom_call.1} parent=5 // pred_region
        // Predicated region
        $region25: #{tpu_custom_call.1} parent=23 // pred_check
          %p136 = pneg %p79
        $region26: #{tpu_custom_call.1} parent=23 // pred_check_branch
          %138 = sbr.rel (%p136) target = $region28
        $region27: #{tpu_custom_call.1} parent=23 // pred_region
          %s139 = sand.u32 %s69, 1
          %s140 = scalar_lea.sflag [#allocation5], %s139
          %s141 = sand.u32 %s69, 1
          %s142 = smul.addr %s141, 32
          %s143 = scalar_lea.vmem [#allocation4], %s142
          %s145 = ssub.s32 512, 512
          %146 = vsyncadd %s140, %s145
          %s147 = smul.addr %s17, 4
          %s148 = smul.addr %s147, 128
          %s149 = scalar_lea.hbm %s2, %s148
          %s151 = sshll.u32 %s143, 4
          %s152 = int_to_ptr.vmem [resolvable:$true] %s151
          %154 = dma.hbm_to_vmem [thread:$0]  %s149, 512, %s152, %s140
        $region28: #{tpu_custom_call.1} parent=23 // pred_fallthru
          _
      $region24: #{tpu_custom_call.1} parent=5 // pred_fallthru
        _
      %p155 = scmp.le.s32.totalorder 1, %s17
      %p156 = scmp.lt.s32.totalorder %s17, 3
      %p157 = pnand %p155, %p156
      %p158 = pneg %p157
      // Predicated region
      $region29: #{tpu_custom_call.1} parent=5 // pred_check
        _
      $region30: #{tpu_custom_call.1} parent=5 // pred_check_branch
        %160 = sbr.rel (%p157) target = $region32
      $region31: #{tpu_custom_call.1} parent=5 // pred_region
        %s161 = ssub.s32 %s17, 1
        %s162 = sand.u32 %s72, 1
        %s163 = scalar_lea.sflag [#allocation5], %s162
        %s164 = sand.u32 %s72, 1
        %s165 = smul.addr %s164, 32
        %s166 = scalar_lea.vmem [#allocation4], %s165
        // Predicated region
        $region33: #{tpu_custom_call.1} parent=31 // pred_check
          %p167 = pneg %p85
        $region34: #{tpu_custom_call.1} parent=31 // pred_check_branch
          %169 = sbr.rel (%p167) target = $region36
        $region35: #{tpu_custom_call.1} parent=31 // pred_region
          %170 = dma.done %s163, 512
        $region36: #{tpu_custom_call.1} parent=31 // pred_fallthru
          _
        %p171 = pneg %p38
        %p172 = pneg %p35
        %p173 = pneg %p59
        %p174 = pneg %p56
        %s175 = sand.u32 %s72, 1
        %s176 = scalar_lea.sflag [#allocation5], %s175
        %s177 = sand.u32 %s72, 1
        %s178 = smul.addr %s177, 32
        %s179 = scalar_lea.vmem [#allocation4], %s178
        %p180 = pneg %p85
        %p181 = pneg %p82
        %p182 = pneg %p111
        %p183 = pneg %p108
        %s184 = sand.u32 %s98, 1
        %s185 = scalar_lea.sflag [#allocation6], %s184
        %s186 = sand.u32 %s98, 1
        %s187 = smul.addr %s186, 32
        %s188 = scalar_lea.vmem [#allocation7], %s187
        %v189 = vld [vmem:[%s166] sm:$0xff]
        %v190 = vld [vmem:[%s166 + $0x8] sm:$0xff]
        %v191 = vld [vmem:[%s166 + $0x10] sm:$0xff]
        %v192 = vld [vmem:[%s166 + $0x18] sm:$0xff]
        %s193 = sld [smem:[#allocation2]]
        %v194 = vstv %s193
        %v195 = vmul.f32 %v189, %v194
        %v196 = vmul.f32 %v190, %v194
        %v197 = vmul.f32 %v191, %v194
        %v198 = vmul.f32 %v192, %v194
        %s199 = sld [smem:[#allocation3]]
        %v200 = vstv %s199
        %v201 = vadd.f32 %v195, %v200
        %v202 = vadd.f32 %v196, %v200
        %v203 = vadd.f32 %v197, %v200
        %v204 = vadd.f32 %v198, %v200
        %205 = vst [vmem:[%s188] sm:$0xff] %v201
        %206 = vst [vmem:[%s188 + $0x8] sm:$0xff] %v202
        %207 = vst [vmem:[%s188 + $0x10] sm:$0xff] %v203
        %208 = vst [vmem:[%s188 + $0x18] sm:$0xff] %v204
        %s209 = sand.u32 %s98, 1
        %s210 = scalar_lea.sflag [#allocation6], %s209
        %s211 = sand.u32 %s98, 1
        %s212 = smul.addr %s211, 32
        %s213 = scalar_lea.vmem [#allocation7], %s212
        // Predicated region
        $region37: #{tpu_custom_call.1} parent=31 // pred_check
          %p214 = pneg %p108
        $region38: #{tpu_custom_call.1} parent=31 // pred_check_branch
          %216 = sbr.rel (%p214) target = $region40
        $region39: #{tpu_custom_call.1} parent=31 // pred_region
          %s218 = ssub.s32 512, 512
          %219 = vsyncadd %s210, %s218
          %s220 = smul.addr %s22, 4
          %s221 = smul.addr %s220, 128
          %s222 = scalar_lea.hbm %s3, %s221
          %s224 = sshll.u32 %s213, 4
          %s225 = int_to_ptr.vmem [resolvable:$true] %s224
          %227 = dma.vmem_to_hbm [thread:$0]  %s225, 512, %s222, %s210
        $region40: #{tpu_custom_call.1} parent=31 // pred_fallthru
          _
      $region32: #{tpu_custom_call.1} parent=5 // pred_fallthru
        _
      %p228 = scmp.le.s32.totalorder 2, %s17
      // Predicated region
      $region41: #{tpu_custom_call.1} parent=5 // pred_check
        %p229 = pneg %p228
      $region42: #{tpu_custom_call.1} parent=5 // pred_check_branch
        %231 = sbr.rel (%p229) target = $region44
      $region43: #{tpu_custom_call.1} parent=5 // pred_region
        %s232 = ssub.s32 %s17, 2
        // Predicated region
        $region45: #{tpu_custom_call.1} parent=43 // pred_check
          %p233 = pneg %p114
        $region46: #{tpu_custom_call.1} parent=43 // pred_check_branch
          %235 = sbr.rel (%p233) target = $region48
        $region47: #{tpu_custom_call.1} parent=43 // pred_region
          %s236 = sand.u32 %s99, 1
          %s237 = scalar_lea.sflag [#allocation6], %s236
          %s238 = sand.u32 %s99, 1
          %s239 = smul.addr %s238, 32
          %s240 = scalar_lea.vmem [#allocation7], %s239
          %241 = dma.done %s237, 512
        $region48: #{tpu_custom_call.1} parent=43 // pred_fallthru
          _
      $region44: #{tpu_custom_call.1} parent=5 // pred_fallthru
        _
    $region6: #{tpu_custom_call.1} parent=1 // loop_footer
      %s21 = sadd.s32 1, %s17
    $region7: #{tpu_custom_call.1} parent=1 // loop_footer_branch
      %16 = sbr.rel target = $region3
    $region8: #{tpu_custom_call.1} parent=1 // loop_exit
      _
    %242 = vsyncpa [#allocation5], 1
    %s243 = scalar_lea.sflag [#allocation5], 1
    %244 = vsyncpa %s243, 1
    %245 = vsyncpa [#allocation6], 1
    %s246 = scalar_lea.sflag [#allocation6], 1
    %247 = vsyncpa %s246, 1

</llo_original>
